<compile_context>
chip_gen: v6e
topology: v6e:2x2x1
jax: 0.10.0
libtpu: 0.0.40
codegen_flags: <defaults>
</compile_context>

<pallas_src>
import functools
import math

import jax
import jax.numpy as jnp
from jax.experimental import pallas as pl
from jax.experimental.pallas import tpu as pltpu


_VMEM_LIMIT = 32 * 1024 * 1024  # explicit scoped-VMEM budget, safe on v5e/v6e/v7x

# Set to jnp.bfloat16 to feed the MXU at full rate on v6e/v7x (accumulation
# stays f32 via preferred_element_type).  Kept f32 here so the numerical
# check against the f32 reference stays tight.
MATMUL_DTYPE = jnp.float32


def _tile(dim, target, align):
    """Largest multiple of `align` that divides `dim` and is <= `target`,
    falling back to the full dim (always a legal block size)."""
    if dim <= target:
        return dim
    t = (target // align) * align
    while t >= align:
        if dim % t == 0:
            return t
        t -= align
    return dim


# ----------------------------------------------------------------------------
# Kernel 1: tiled matmul with K-reduction accumulator (Q/K/V projections)
# ----------------------------------------------------------------------------
def _matmul_kernel(x_ref, w_ref, o_ref, acc_ref):
    @pl.when(pl.program_id(2) == 0)
    def _():
        acc_ref[...] = jnp.zeros_like(acc_ref)

    acc_ref[...] += jnp.dot(x_ref[...].astype(MATMUL_DTYPE),
                            w_ref[...].astype(MATMUL_DTYPE),
                            preferred_element_type=jnp.float32)

    @pl.when(pl.program_id(2) == pl.num_programs(2) - 1)
    def _():
        o_ref[...] = acc_ref[...].astype(o_ref.dtype)


def linear_nobias(x2d, w, *, tm=256, tn=256, tk=256):
    M, K = x2d.shape
    K2, N = w.shape
    assert K == K2
    tm = _tile(M, tm, 8)
    tn = _tile(N, tn, 128)
    tk = _tile(K, tk, 128)
    grid = (M // tm, N // tn, K // tk)
    return pl.pallas_call(
        _matmul_kernel,
        out_shape=jax.ShapeDtypeStruct((M, N), jnp.float32),
        grid=grid,
        in_specs=[pl.BlockSpec((tm, tk), lambda i, j, k: (i, k)),
                  pl.BlockSpec((tk, tn), lambda i, j, k: (k, j))],
        out_specs=pl.BlockSpec((tm, tn), lambda i, j, k: (i, j)),
        scratch_shapes=[pltpu.VMEM((tm, tn), jnp.float32)],
        compiler_params=pltpu.CompilerParams(
            dimension_semantics=("parallel", "parallel", "arbitrary"),
            vmem_limit_bytes=_VMEM_LIMIT),
        cost_estimate=pl.CostEstimate(
            flops=2 * M * N * K, transcendentals=0,
            bytes_accessed=4 * (M * K + K * N + M * N)),
    )(x2d, w)


# ----------------------------------------------------------------------------
# Kernel 2: scaled dot-product attention.
#   Grid = (batch, query_tiles).  All heads of a batch element are processed
#   per grid step from the (b, len, n_head*d) layout (static lane slices),
#   the output is written already head-concatenated in (b, lq, n_head*d_v),
#   and the single (b, lq, lk) mask is reused across heads via the BlockSpec.
# ----------------------------------------------------------------------------
def _attn_kernel(q_ref, k_ref, v_ref, m_ref, out_ref, attn_ref, *,
                 n_head, d_k, d_v, inv_temperature):
    q_full = q_ref[0]                       # (tq, n_head*d_k)
    k_full = k_ref[0]                       # (lk, n_head*d_k)
    v_full = v_ref[0]                       # (lk, n_head*d_v)
    mask = m_ref[0]                         # (tq, lk), 1.0 == masked
    neg_big = jnp.float32(-10000000000.0)

    head_outs = []
    for h in range(n_head):                 # static unroll over heads
        qh = q_full[:, h * d_k:(h + 1) * d_k]
        kh = k_full[:, h * d_k:(h + 1) * d_k]
        vh = v_full[:, h * d_v:(h + 1) * d_v]

        # 'qd,kd->qk' on the MXU -- no explicit k.T (XLU transpose) needed.
        scores = jax.lax.dot_general(
            qh.astype(MATMUL_DTYPE), kh.astype(MATMUL_DTYPE),
            (((1,), (1,)), ((), ())),
            preferred_element_type=jnp.float32) * inv_temperature
        scores = jnp.where(mask > 0.0, neg_big, scores)

        # softmax over keys (torch Softmax(dim=2)); reciprocal only touches
        # the reduced (tq, 1) column, so the exact path is effectively free.
        scores = scores - jnp.max(scores, axis=-1, keepdims=True)
        e = jnp.exp(scores)
        attn = e * pl.reciprocal(jnp.sum(e, axis=-1, keepdims=True),
                                 approx=False)

        attn_ref[h, 0] = attn
        head_outs.append(jnp.dot(attn.astype(MATMUL_DTYPE),
                                 vh.astype(MATMUL_DTYPE),
                                 preferred_element_type=jnp.float32))

    # Single lane-dense store of the head-concatenated output block.
    out_ref[0] = jnp.concatenate(head_outs, axis=-1).astype(out_ref.dtype)


def scaled_dot_product_attention(qp, kp, vp, mask_f, *, n_head, d_k, d_v,
                                 inv_temperature, tq=256):
    b, lq, _ = qp.shape
    _, lk, _ = kp.shape
    tq = _tile(lq, tq, 8)
    grid = (b, lq // tq)
    kern = functools.partial(_attn_kernel, n_head=n_head, d_k=d_k, d_v=d_v,
                             inv_temperature=inv_temperature)
    out, attn = pl.pallas_call(
        kern,
        out_shape=(jax.ShapeDtypeStruct((b, lq, n_head * d_v), jnp.float32),
                   jax.ShapeDtypeStruct((n_head, b, lq, lk), jnp.float32)),
        grid=grid,
        in_specs=[
            pl.BlockSpec((1, tq, n_head * d_k), lambda bi, qi: (bi, qi, 0)),
            pl.BlockSpec((1, lk, n_head * d_k), lambda bi, qi: (bi, 0, 0)),
            pl.BlockSpec((1, lk, n_head * d_v), lambda bi, qi: (bi, 0, 0)),
            pl.BlockSpec((1, tq, lk), lambda bi, qi: (bi, qi, 0)),
        ],
        out_specs=(
            pl.BlockSpec((1, tq, n_head * d_v), lambda bi, qi: (bi, qi, 0)),
            pl.BlockSpec((n_head, 1, tq, lk), lambda bi, qi: (0, bi, qi, 0)),
        ),
        compiler_params=pltpu.CompilerParams(
            dimension_semantics=("parallel", "parallel"),
            vmem_limit_bytes=_VMEM_LIMIT),
    )(qp, kp, vp, mask_f)
    return out, attn


# ----------------------------------------------------------------------------
# Kernel 3: fc (with bias) + residual add + LayerNorm, tiled over rows
# ----------------------------------------------------------------------------
def _fc_ln_kernel(x_ref, w_ref, b_ref, res_ref, g_ref, beta_ref, o_ref, *, eps):
    y = jnp.dot(x_ref[...].astype(MATMUL_DTYPE),
                w_ref[...].astype(MATMUL_DTYPE),
                preferred_element_type=jnp.float32)
    y = y + b_ref[...] + res_ref[...]
    mu = jnp.mean(y, axis=-1, keepdims=True)
    var = jnp.mean((y - mu) * (y - mu), axis=-1, keepdims=True)
    o_ref[...] = ((y - mu) * jax.lax.rsqrt(var + eps)) * g_ref[...] + beta_ref[...]


def fc_residual_layernorm(x2d, w, bias, res2d, gamma, beta, *, eps=1e-5, tm=256):
    M, K = x2d.shape
    _, N = w.shape
    tm = _tile(M, tm, 8)
    grid = (M // tm,)
    kern = functools.partial(_fc_ln_kernel, eps=eps)
    return pl.pallas_call(
        kern,
        out_shape=jax.ShapeDtypeStruct((M, N), jnp.float32),
        grid=grid,
        in_specs=[pl.BlockSpec((tm, K), lambda i: (i, 0)),
                  pl.BlockSpec((K, N), lambda i: (0, 0)),
                  pl.BlockSpec((1, N), lambda i: (0, 0)),
                  pl.BlockSpec((tm, N), lambda i: (i, 0)),
                  pl.BlockSpec((1, N), lambda i: (0, 0)),
                  pl.BlockSpec((1, N), lambda i: (0, 0))],
        out_specs=pl.BlockSpec((tm, N), lambda i: (i, 0)),
        compiler_params=pltpu.CompilerParams(
            dimension_semantics=("parallel",),
            vmem_limit_bytes=_VMEM_LIMIT),
    )(x2d, w, bias, res2d, gamma, beta)


# ----------------------------------------------------------------------------
# Full MultiHeadAttention forward
# ----------------------------------------------------------------------------
def multi_head_attention(q, k, v, mask, params, *, n_head, d_k, d_v):
    b, lq, d_model = q.shape
    _, lk, _ = k.shape
    _, lv, _ = v.shape
    residual = q

    # Projections: tiled Pallas matmuls; outputs stay in (b, len, n_head*d)
    # layout (head split happens inside the attention kernel -> no HBM
    # transposes between kernels).
    Q = linear_nobias(q.reshape(b * lq, d_model), params["w_qs"]
                      ).reshape(b, lq, n_head * d_k)
    K = linear_nobias(k.reshape(b * lk, d_model), params["w_ks"]
                      ).reshape(b, lk, n_head * d_k)
    V = linear_nobias(v.reshape(b * lv, d_model), params["w_vs"]
                      ).reshape(b, lv, n_head * d_v)

    # Single (b, lq, lk) mask shared across heads (no n_head tiling in HBM).
    mask_f = mask.astype(jnp.float32)
    inv_temperature = 1.0 / (float(d_k) ** 0.5)

    out, attn = scaled_dot_product_attention(
        Q, K, V, mask_f, n_head=n_head, d_k=d_k, d_v=d_v,
        inv_temperature=inv_temperature)

    # fc + bias + residual + LayerNorm fused, row-tiled.
    o = fc_residual_layernorm(
        out.reshape(b * lq, n_head * d_v), params["fc_w"], params["fc_b"],
        residual.reshape(b * lq, d_model), params["ln_g"], params["ln_b"])

    # attn is produced as (n_head, b, lq, lk) == head-major, the same memory
    # layout as the PyTorch (n_head*b, lq, lk) result -> free reshape.
    return o.reshape(b, lq, d_model), attn.reshape(n_head * b, lq, lk)


# ----------------------------------------------------------------------------
# Pure-JAX reference (for correctness check)
# ----------------------------------------------------------------------------
def reference(q, k, v, mask, params, *, n_head, d_k, d_v):
    b, lq, d_model = q.shape
    _, lk, _ = k.shape
    residual = q
    Q = (q.reshape(b * lq, d_model) @ params["w_qs"]).reshape(b, lq, n_head, d_k)
    K = (k.reshape(b * lk, d_model) @ params["w_ks"]).reshape(b, lk, n_head, d_k)
    V = (v.reshape(b * lk, d_model) @ params["w_vs"]).reshape(b, lk, n_head, d_v)
    Qh = jnp.transpose(Q, (2, 0, 1, 3)).reshape(n_head * b, lq, d_k)
    Kh = jnp.transpose(K, (2, 0, 1, 3)).reshape(n_head * b, lk, d_k)
    Vh = jnp.transpose(V, (2, 0, 1, 3)).reshape(n_head * b, lk, d_v)
    mask_h = jnp.tile(mask, (n_head, 1, 1))
    scores = jnp.einsum("bqd,bkd->bqk", Qh, Kh) / (float(d_k) ** 0.5)
    scores = jnp.where(mask_h, -10000000000.0, scores)
    attn = jax.nn.softmax(scores, axis=-1)
    out = jnp.einsum("bqk,bkd->bqd", attn, Vh)
    out = jnp.transpose(out.reshape(n_head, b, lq, d_v), (1, 2, 0, 3)).reshape(
        b, lq, n_head * d_v)
    y = out @ params["fc_w"] + params["fc_b"][0] + residual
    mu = jnp.mean(y, axis=-1, keepdims=True)
    var = jnp.mean((y - mu) ** 2, axis=-1, keepdims=True)
    y = (y - mu) / jnp.sqrt(var + 1e-5) * params["ln_g"][0] + params["ln_b"][0]
    return y, attn


if __name__ == "__main__":
    # Small, forward-consistent shapes
    b, seq, d_model = 2, 8, 32
    n_head, d_k, d_v = 2, 16, 16

    key = jax.random.PRNGKey(0)
    k_qs, k_ks, k_vs, k_fc, k_fcb, k_q, k_k, k_v, k_m = jax.random.split(key, 9)

    std_qk = math.sqrt(2.0 / (d_model + d_k))
    std_v = math.sqrt(2.0 / (d_model + d_v))
    fc_std = math.sqrt(2.0 / (n_head * d_v + d_model))
    bound = 1.0 / math.sqrt(n_head * d_v)

    params = {
        # stored as (in, out) == PyTorch weight transposed
        "w_qs": (std_qk * jax.random.normal(k_qs, (d_model, n_head * d_k))
                 ).astype(jnp.float32),
        "w_ks": (std_qk * jax.random.normal(k_ks, (d_model, n_head * d_k))
                 ).astype(jnp.float32),
        "w_vs": (std_v * jax.random.normal(k_vs, (d_model, n_head * d_v))
                 ).astype(jnp.float32),
        "fc_w": (fc_std * jax.random.normal(k_fc, (n_head * d_v, d_model))
                 ).astype(jnp.float32),
        "fc_b": jax.random.uniform(k_fcb, (1, d_model), minval=-bound,
                                   maxval=bound).astype(jnp.float32),
        "ln_g": jnp.ones((1, d_model), jnp.float32),
        "ln_b": jnp.zeros((1, d_model), jnp.float32),
    }

    q = jax.random.normal(k_q, (b, seq, d_model), dtype=jnp.float32)
    kk = jax.random.normal(k_k, (b, seq, d_model), dtype=jnp.float32)
    v = jax.random.normal(k_v, (b, seq, d_model), dtype=jnp.float32)
    # boolean mask (True == masked out), deterministic
    mask = jax.random.bernoulli(k_m, p=0.2, shape=(b, seq, seq))

    out, attn = multi_head_attention(q, kk, v, mask, params,
                                     n_head=n_head, d_k=d_k, d_v=d_v)
    out = jax.block_until_ready(out)
    attn = jax.block_until_ready(attn)

    ref_out, ref_attn = reference(q, kk, v, mask, params,
                                  n_head=n_head, d_k=d_k, d_v=d_v)
    assert out.shape == (b, seq, d_model)
    assert attn.shape == (n_head * b, seq, seq)
    assert jnp.allclose(out, ref_out, atol=1e-4, rtol=1e-4)
    assert jnp.allclose(attn, ref_attn, atol=1e-5, rtol=1e-4)

    print("KERNEL_OK")
</pallas_src>

<mosaic_0001>
module attributes {stable_mosaic.version = 11 : i64} {
  func.func @_matmul_kernel(%arg0: i32, %arg1: i32, %arg2: i32, %arg3: memref<16x32xf32, #tpu.memory_space<vmem>>, %arg4: memref<32x32xf32, #tpu.memory_space<vmem>>, %arg5: memref<16x32xf32, #tpu.memory_space<vmem>>, %arg6: memref<16x32xf32, #tpu.memory_space<vmem>>) attributes {dimension_semantics = [#tpu.dimension_semantics<parallel>, #tpu.dimension_semantics<parallel>, #tpu.dimension_semantics<arbitrary>], iteration_bounds = array<i64: 1, 1, 1>, scalar_prefetch = 0 : i64, scratch_operands = 1 : i64, tpu.core_type = #tpu.core_type<tc>, window_params = [{transform_indices = @transform_0, window_bounds = array<i64: 16, 32>}, {transform_indices = @transform_1, window_bounds = array<i64: 32, 32>}, {transform_indices = @transform_2, window_bounds = array<i64: 16, 32>}]} {
    %c0_i32 = arith.constant 0 : i32
    %0 = arith.cmpi eq, %arg2, %c0_i32 : i32
    %1 = arith.extui %0 : i1 to i32
    %c0_i32_0 = arith.constant 0 : i32
    %2 = arith.cmpi ne, %1, %c0_i32_0 : i32
    scf.if %2 {
      %cst_10 = arith.constant 0.000000e+00 : f32
      %12 = vector.broadcast %cst_10 : f32 to vector<16x32xf32>
      %c0_11 = arith.constant 0 : index
      %c0_12 = arith.constant 0 : index
      %13 = vector.load %arg6[%c0_11, %c0_12] : memref<16x32xf32, #tpu.memory_space<vmem>>, vector<16x32xf32>
      tpu.vector_store %arg6[%c0_11, %c0_12], %12 {strides = array<i32>} : memref<16x32xf32, #tpu.memory_space<vmem>>, vector<16x32xf32>,
    } else {
    }
    %c0 = arith.constant 0 : index
    %c0_1 = arith.constant 0 : index
    %3 = vector.load %arg6[%c0, %c0_1] : memref<16x32xf32, #tpu.memory_space<vmem>>, vector<16x32xf32>
    %c0_2 = arith.constant 0 : index
    %c0_3 = arith.constant 0 : index
    %4 = vector.load %arg3[%c0_2, %c0_3] : memref<16x32xf32, #tpu.memory_space<vmem>>, vector<16x32xf32>
    %c0_4 = arith.constant 0 : index
    %c0_5 = arith.constant 0 : index
    %5 = vector.load %arg4[%c0_4, %c0_5] : memref<32x32xf32, #tpu.memory_space<vmem>>, vector<32x32xf32>
    %cst = arith.constant dense<0.000000e+00> : vector<16x32xf32>
    %6 = tpu.matmul %4, %5, %cst {dimension_numbers = #tpu.dot_dimension_numbers<[1], [0], [0], [1], [0, 0, 1, 1], [], []>} : vector<16x32xf32>, vector<32x32xf32>, vector<16x32xf32> -> vector<16x32xf32>
    %7 = arith.addf %3, %6 : vector<16x32xf32>
    %c0_6 = arith.constant 0 : index
    %c0_7 = arith.constant 0 : index
    %8 = vector.load %arg6[%c0_6, %c0_7] : memref<16x32xf32, #tpu.memory_space<vmem>>, vector<16x32xf32>
    tpu.vector_store %arg6[%c0_6, %c0_7], %7 {strides = array<i32>} : memref<16x32xf32, #tpu.memory_space<vmem>>, vector<16x32xf32>,
    %c0_i32_8 = arith.constant 0 : i32
    %9 = arith.cmpi eq, %arg2, %c0_i32_8 : i32
    %10 = arith.extui %9 : i1 to i32
    %c0_i32_9 = arith.constant 0 : i32
    %11 = arith.cmpi ne, %10, %c0_i32_9 : i32
    scf.if %11 {
      %c0_10 = arith.constant 0 : index
      %c0_11 = arith.constant 0 : index
      %12 = vector.load %arg6[%c0_10, %c0_11] : memref<16x32xf32, #tpu.memory_space<vmem>>, vector<16x32xf32>
      %c0_12 = arith.constant 0 : index
      %c0_13 = arith.constant 0 : index
      %13 = vector.load %arg5[%c0_12, %c0_13] : memref<16x32xf32, #tpu.memory_space<vmem>>, vector<16x32xf32>
      tpu.vector_store %arg5[%c0_12, %c0_13], %12 {strides = array<i32>} : memref<16x32xf32, #tpu.memory_space<vmem>>, vector<16x32xf32>,
    } else {
    }
    return
  }
  func.func @transform_0(%arg0: i32, %arg1: i32, %arg2: i32) -> (i32, i32) {
    %c0_i32 = arith.constant 0 : i32
    return %arg0, %arg2 : i32, i32
  }
  func.func @transform_1(%arg0: i32, %arg1: i32, %arg2: i32) -> (i32, i32) {
    %c0_i32 = arith.constant 0 : i32
    return %arg2, %arg1 : i32, i32
  }
  func.func @transform_2(%arg0: i32, %arg1: i32, %arg2: i32) -> (i32, i32) {
    %c0_i32 = arith.constant 0 : i32
    return %arg0, %arg1 : i32, i32
  }
}

</mosaic_0001>

<llo_original>
// kernel: tpu_custom_call.1
$region0: #{tpu_custom_call.1}
  #allocation0 [shape = 'u32[]', space=smem, size = 0x4, offset = 0x4, fixed_abs, tag = 'smem constant byte address 0x4 - core index']
  #allocation1 [shape = 'u32[144,128]{1,0:T(1,128)}', space=vmem, size = 0x12000, scoped, tag = 'internal scratch']
  #allocation2 [shape = 'f32[16,32]{1,0:T(8,128)}', space=vmem, size = 0x2000, scoped, tag = 'scratch operand']
  %s0 = inlined_call_operand.hbm [shape: f32[16,32], index: 0, kind: input, shape index: {}]
  %s1 = inlined_call_operand.hbm [shape: f32[32,32], index: 1, kind: input, shape index: {}]
  %s2 = inlined_call_operand.hbm [shape: f32[16,32], index: 2, kind: output, shape index: {}]
  %s3 = sld [smem:[#allocation0]]
  $region34: #{tpu_custom_call.1} parent=0
    _
  %s5 = ssub.s32 1, %s3
  %s6 = scalar_select 0, %s5, %s3
  $region1: #{tpu_custom_call.1} parent=0
    #allocation3 [shape = 'u8[8192]{0}', space=vmem, size = 0x2000, scoped, tag = 'input window, operand 0, single buffered']
    #allocation4 [shape = 's32[1]{0}', space=sflag, size = 0x4, scoped, tag = 'scoped memory for tpu_custom_call.1']
    #allocation5 [shape = 's32[1]{0}', space=sflag, size = 0x4, scoped, tag = 'scoped memory for tpu_custom_call.1']
    #allocation6 [shape = 'u8[16384]{0}', space=vmem, size = 0x4000, scoped, tag = 'input window, operand 1, single buffered']
    #allocation7 [shape = 's32[1]{0}', space=sflag, size = 0x4, scoped, tag = 'scoped memory for tpu_custom_call.1']
    #allocation8 [shape = 'u8[8192]{0}', space=vmem, size = 0x2000, scoped, tag = 'output window, operand 0, single buffered']
    %7 = vsyncpa [#allocation4], 0
    %8 = vsyncpa [#allocation7], 0
    %9 = vsyncpa [#allocation5], 0
    // Predicated region
    $region2: #{tpu_custom_call.1} parent=1 // pred_check
      _
    $region3: #{tpu_custom_call.1} parent=1 // pred_check_branch
      %11 = sbr.rel (0) target = $region5
    $region4: #{tpu_custom_call.1} parent=1 // pred_region
      %s13 = ssub.s32 256, 256
      %14 = vsyncadd [#allocation4], %s13
      %s15 = sshll.u32 [#allocation3], 4
      %s16 = int_to_ptr.vmem [resolvable:$true] %s15
      %21 = dma.hbm_to_vmem [thread:$0]  %s0, 256, %s16, [#allocation4], 128, 128, 8
    $region5: #{tpu_custom_call.1} parent=1 // pred_fallthru
      _
    // Predicated region
    $region6: #{tpu_custom_call.1} parent=1 // pred_check
      _
    $region7: #{tpu_custom_call.1} parent=1 // pred_check_branch
      %23 = sbr.rel (0) target = $region9
    $region8: #{tpu_custom_call.1} parent=1 // pred_region
      %s25 = ssub.s32 512, 512
      %26 = vsyncadd [#allocation7], %s25
      %s27 = sshll.u32 [#allocation6], 4
      %s28 = int_to_ptr.vmem [resolvable:$true] %s27
      %33 = dma.hbm_to_vmem [thread:$0]  %s1, 512, %s28, [#allocation7], 128, 128, 8
    $region9: #{tpu_custom_call.1} parent=1 // pred_fallthru
      _
    // Predicated region
    $region10: #{tpu_custom_call.1} parent=1 // pred_check
      _
    $region11: #{tpu_custom_call.1} parent=1 // pred_check_branch
      %35 = sbr.rel (0) target = $region13
    $region12: #{tpu_custom_call.1} parent=1 // pred_region
      %36 = dma.done [#allocation4], 256
    $region13: #{tpu_custom_call.1} parent=1 // pred_fallthru
      _
    // Predicated region
    $region14: #{tpu_custom_call.1} parent=1 // pred_check
      _
    $region15: #{tpu_custom_call.1} parent=1 // pred_check_branch
      %38 = sbr.rel (0) target = $region17
    $region16: #{tpu_custom_call.1} parent=1 // pred_region
      %39 = dma.done [#allocation7], 512
    $region17: #{tpu_custom_call.1} parent=1 // pred_fallthru
      _
    %p40 = scmp.eq.s32.totalorder 0, 0
    // Predicated region
    $region18: #{tpu_custom_call.1} parent=1 // pred_check
      %p41 = pneg %p40
    $region19: #{tpu_custom_call.1} parent=1 // pred_check_branch
      %43 = sbr.rel (%p41) target = $region21
    $region20: #{tpu_custom_call.1} parent=1 // pred_region
      %vm44 = vcmask 261120
      %45 = vst.msk [vmem:[#allocation2] sm:$0xff] %vm44, 0.0
      %46 = vst.msk [vmem:[#allocation2 + $0x8] sm:$0xff] %vm44, 0.0
    $region21: #{tpu_custom_call.1} parent=1 // pred_fallthru
      _
    %v47 = vld [vmem:[#allocation2] sm:$0xff]
    %v48 = vld [vmem:[#allocation2 + $0x8] sm:$0xff]
    %v49 = vld [vmem:[#allocation3] sm:$0xff]
    %v50 = vld [vmem:[#allocation3 + $0x8] sm:$0xff]
    %v51 = vld [vmem:[#allocation6] sm:$0xff]
    %v52 = vld [vmem:[#allocation6 + $0x8] sm:$0xff]
    %v53 = vld [vmem:[#allocation6 + $0x10] sm:$0xff]
    %v54 = vld [vmem:[#allocation6 + $0x18] sm:$0xff]
    %vm55 = vcmask 261120
    %v57 = vsel %vm55, %v49, 0
    %v60 = vsel %vm55, %v50, 0
    %62 = vmatprep.subr.mxu0 0.0
    %63 = vmatpush1.msra.mxu0 0.0
    %64 = vmatprep.subr.mxu0 0.0
    %65 = vmatpush1.msra.mxu0 0.0
    %66 = vmatprep.subr.mxu0 0.0
    %67 = vmatpush1.msra.mxu0 0.0
    %68 = vmatprep.subr.mxu0 0.0
    %69 = vmatpush1.msra.mxu0 0.0
    %70 = vmatprep.subr.mxu0 0.0
    %71 = vmatpush1.msra.mxu0 0.0
    %72 = vmatprep.subr.mxu0 0.0
    %73 = vmatpush1.msra.mxu0 0.0
    %74 = vmatprep.subr.mxu0 0.0
    %75 = vmatpush1.msra.mxu0 0.0
    %76 = vmatprep.subr.mxu0 0.0
    %77 = vmatpush1.msra.mxu0 0.0
    %78 = vmatprep.subr.mxu0 0.0
    %79 = vmatpush1.msra.mxu0 0.0
    %80 = vmatprep.subr.mxu0 0.0
    %81 = vmatpush1.msra.mxu0 0.0
    %82 = vmatprep.subr.mxu0 0.0
    %83 = vmatpush1.msra.mxu0 0.0
    %84 = vmatprep.subr.mxu0 0.0
    %85 = vmatpush1.msra.mxu0 0.0
    %86 = vmatprep.subr.mxu0 0.0
    %87 = vmatpush1.msra.mxu0 %v54
    %88 = vmatprep.subr.mxu0 0.0
    %89 = vmatpush1.msra.mxu0 %v53
    %90 = vmatprep.subr.mxu0 0.0
    %91 = vmatpush1.msra.mxu0 %v52
    %92 = vmatprep.subr.mxu0 0.0
    %93 = vmatpush1.msra.mxu0 %v51
    %94 = vmatprep.subr.mxu0 0.0
    %95 = vmatpush2.msra.mxu0 0.0
    %96 = vmatprep.subr.mxu0 0.0
    %97 = vmatpush2.msra.mxu0 0.0
    %98 = vmatprep.subr.mxu0 0.0
    %99 = vmatpush2.msra.mxu0 0.0
    %100 = vmatprep.subr.mxu0 0.0
    %101 = vmatpush2.msra.mxu0 0.0
    %102 = vmatprep.subr.mxu0 0.0
    %103 = vmatpush2.msra.mxu0 0.0
    %104 = vmatprep.subr.mxu0 0.0
    %105 = vmatpush2.msra.mxu0 0.0
    %106 = vmatprep.subr.mxu0 0.0
    %107 = vmatpush2.msra.mxu0 0.0
    %108 = vmatprep.subr.mxu0 0.0
    %109 = vmatpush2.msra.mxu0 0.0
    %110 = vmatprep.subr.mxu0 0.0
    %111 = vmatpush2.msra.mxu0 0.0
    %112 = vmatprep.subr.mxu0 0.0
    %113 = vmatpush2.msra.mxu0 0.0
    %114 = vmatprep.subr.mxu0 0.0
    %115 = vmatpush2.msra.mxu0 0.0
    %116 = vmatprep.subr.mxu0 0.0
    %117 = vmatpush2.msra.mxu0 0.0
    %118 = vmatprep.subr.mxu0 0.0
    %119 = vmatpush2.msra.mxu0 0.0
    %120 = vmatprep.subr.mxu0 0.0
    %121 = vmatpush2.msra.mxu0 0.0
    %122 = vmatprep.subr.mxu0 0.0
    %123 = vmatpush2.msra.mxu0 0.0
    %124 = vmatprep.subr.mxu0 0.0
    %125 = vmatpush2.msra.mxu0 0.0
    %126 = vmatprep.mubr.f32.mxu0 0.0
    %127 = vmatmul.mubr.f32.gmra.mxu0 %v57
    %v128 = vpop.f32.mrf.mxu0
    %v129 = vadd.f32 0.0, %v128
    %v130 = vpop.f32.mrf.mxu0
    %131 = vmatprep.mubr.f32.mxu0 0.0
    %132 = vmatmul.mubr.f32.gmra.mxu0 %v60
    %v133 = vpop.f32.mrf.mxu0
    %v134 = vadd.f32 0.0, %v133
    %v135 = vpop.f32.mrf.mxu0
    %136 = vdwg.mxu0
    %v137 = vadd.f32 %v47, %v129
    %v138 = vadd.f32 %v48, %v134
    %139 = vst.msk [vmem:[#allocation2] sm:$0xff] %vm55, %v137
    %140 = vst.msk [vmem:[#allocation2 + $0x8] sm:$0xff] %vm55, %v138
    // Predicated region
    $region22: #{tpu_custom_call.1} parent=1 // pred_check
      %p141 = pneg %p40
    $region23: #{tpu_custom_call.1} parent=1 // pred_check_branch
      %143 = sbr.rel (%p141) target = $region25
    $region24: #{tpu_custom_call.1} parent=1 // pred_region
      %v144 = vld [vmem:[#allocation2] sm:$0xff]
      %v145 = vld [vmem:[#allocation2 + $0x8] sm:$0xff]
      %146 = vst.msk [vmem:[#allocation8] sm:$0xff] %vm55, %v144
      %147 = vst.msk [vmem:[#allocation8 + $0x8] sm:$0xff] %vm55, %v145
    $region25: #{tpu_custom_call.1} parent=1 // pred_fallthru
      _
    // Predicated region
    $region26: #{tpu_custom_call.1} parent=1 // pred_check
      _
    $region27: #{tpu_custom_call.1} parent=1 // pred_check_branch
      %149 = sbr.rel (0) target = $region29
    $region28: #{tpu_custom_call.1} parent=1 // pred_region
      %s151 = ssub.s32 256, 256
      %152 = vsyncadd [#allocation5], %s151
      %s153 = sshll.u32 [#allocation8], 4
      %s154 = int_to_ptr.vmem [resolvable:$true] %s153
      %159 = dma.vmem_to_hbm [thread:$0]  %s154, 256, %s2, [#allocation5], 128, 128, 8
    $region29: #{tpu_custom_call.1} parent=1 // pred_fallthru
      _
    // Predicated region
    $region30: #{tpu_custom_call.1} parent=1 // pred_check
      _
    $region31: #{tpu_custom_call.1} parent=1 // pred_check_branch
      %161 = sbr.rel (0) target = $region33
    $region32: #{tpu_custom_call.1} parent=1 // pred_region
      %162 = dma.done [#allocation5], 256
    $region33: #{tpu_custom_call.1} parent=1 // pred_fallthru
      _
    %163 = vsyncpa [#allocation4], 1
    %164 = vsyncpa [#allocation7], 1
    %165 = vsyncpa [#allocation5], 1

</llo_original>
